<compile_context>
chip_gen: v7x
topology: tpu7x:2x2x1
jax: 0.10.0
libtpu: 0.0.40
codegen_flags: <defaults>
</compile_context>

<pallas_src>
import jax
import jax.numpy as jnp
from jax.experimental import pallas as pl
from jax.experimental.pallas import tpu as pltpu


def _round_up(x, m):
    return ((x + m - 1) // m) * m


def _xnor_matmul_kernel(p_ref, w_ref, s_ref, o_ref):
    # p_ref: (tm, tk)     bf16 sign(x) im2col patches (zeros at padding)
    # w_ref: (tk, O_pad)  bf16 sign(W) reshaped weights
    # s_ref: (1, O_pad)   f32  scale_x[n] * scale_w[o] (this sample's row)
    # o_ref: (tm, O_pad)  f32  output tile == accumulator (resident over k)
    k = pl.program_id(2)

    @pl.when(k == 0)
    def _():
        o_ref[...] = jnp.zeros_like(o_ref)

    o_ref[...] += jnp.dot(p_ref[...], w_ref[...],
                          preferred_element_type=jnp.float32)

    @pl.when(k == pl.num_programs(2) - 1)
    def _():
        o_ref[...] = o_ref[...] * s_ref[...]


def xnor_conv2d(x, weight, *, stride=1, padding=0, tm=256, tk=512):
    """XNORConv2d forward. x: (N, C, H, W) NCHW, weight: (O, C, K, K)."""
    N, C, H, W = x.shape
    O, C_w, K, K2 = weight.shape
    assert C_w == C and K == K2

    Ho = (H + 2 * padding - K) // stride + 1
    Wo = (W + 2 * padding - K) // stride + 1
    Kd = C * K * K          # contraction size
    P = Ho * Wo             # output positions per sample

    # ---- tile / padding plan (MXU-shaped, lane-dense output) ------------
    tm_eff = min(tm, _round_up(P, 128))          # rows per tile (mult of 128)
    tk_eff = min(tk, _round_up(Kd, 128))         # contraction tile
    P_pad = _round_up(P, tm_eff)
    Kd_pad = _round_up(Kd, tk_eff)
    O_pad = _round_up(O, 128)                    # lane-dense output width

    # ---- glue: scaling factors (tiny reductions, on the RAW values) -----
    scale_x = jnp.mean(jnp.abs(x), axis=(1, 2, 3))           # (N,)
    scale_w = jnp.mean(jnp.abs(weight), axis=(1, 2, 3))      # (O,)
    scale_w_pad = jnp.pad(scale_w, (0, O_pad - O))
    scales = (scale_x[:, None, None] *
              scale_w_pad[None, None, :]).astype(jnp.float32)  # (N,1,O_pad)

    # ---- glue: pre-binarize, THEN im2col (bf16 = exact for {-1,0,+1}) ---
    x_sign = jnp.sign(x).astype(jnp.bfloat16)
    x_pad = jnp.pad(x_sign,
                    ((0, 0), (0, 0), (padding, padding), (padding, padding)))
    cols = []
    for dh in range(K):
        for dw in range(K):
            cols.append(x_pad[:, :, dh:dh + stride * Ho:stride,
                                    dw:dw + stride * Wo:stride])  # (N,C,Ho,Wo)
    patches = jnp.stack(cols, axis=2)              # (N, C, K*K, Ho, Wo)
    patches = patches.reshape(N, Kd, Ho, Wo)       # flatten (C, kh, kw)
    patches = patches.transpose(0, 2, 3, 1).reshape(N, P, Kd)
    patches = jnp.pad(patches, ((0, 0), (0, P_pad - P), (0, Kd_pad - Kd)))

    w_sign = jnp.sign(weight).astype(jnp.bfloat16).reshape(O, Kd).T  # (Kd,O)
    w_mat = jnp.pad(w_sign, ((0, Kd_pad - Kd), (0, O_pad - O)))

    # ---- Pallas call: grid (sample, row-tile, k-tile) --------------------
    grid = (N, P_pad // tm_eff, Kd_pad // tk_eff)
    out = pl.pallas_call(
        _xnor_matmul_kernel,
        out_shape=jax.ShapeDtypeStruct((N, P_pad, O_pad), jnp.float32),
        grid_spec=pltpu.PrefetchScalarGridSpec(
            num_scalar_prefetch=0,
            grid=grid,
            in_specs=[
                # streaming patch tiles (per sample, per row-tile, per k-tile)
                pl.BlockSpec((None, tm_eff, tk_eff),
                             lambda n, m, k: (n, m, k)),
                # weights: only vary along k
                pl.BlockSpec((tk_eff, O_pad), lambda n, m, k: (k, 0)),
                # combined scales: only vary along n, lane-dense
                pl.BlockSpec((None, 1, O_pad), lambda n, m, k: (n, 0, 0)),
            ],
            # output block index is constant in k -> resident accumulator
            out_specs=pl.BlockSpec((None, tm_eff, O_pad),
                                   lambda n, m, k: (n, m, 0)),
        ),
        compiler_params=pltpu.CompilerParams(
            # reduction axis last / arbitrary; n,m shard across megacore TCs.
            dimension_semantics=("parallel", "parallel", "arbitrary")),
    )(patches, w_mat, scales)

    y = out[:, :P, :O].reshape(N, Ho, Wo, O).transpose(0, 3, 1, 2)  # -> NCHW
    return y


def _reference(x, weight, stride, padding):
    # pure-JAX reference of the same forward math (for sanity checking)
    scale_x = jnp.mean(jnp.abs(x), axis=(1, 2, 3), keepdims=True)
    x_bin = scale_x * jnp.sign(x)
    scale_w = jnp.mean(jnp.abs(weight), axis=(1, 2, 3), keepdims=True)
    w_bin = scale_w * jnp.sign(weight)
    return jax.lax.conv_general_dilated(
        x_bin, w_bin, window_strides=(stride, stride),
        padding=[(padding, padding), (padding, padding)],
        dimension_numbers=("NCHW", "OIHW", "NCHW"))


if __name__ == "__main__":
    # Module config: XNORConv2d(in_channels=4, out_channels=8, kernel_size=3,
    #                           stride=1, padding=1)
    in_channels, out_channels, kernel_size = 4, 8, 3
    stride, padding = 1, 1

    key = jax.random.PRNGKey(0)
    kx, kw = jax.random.split(key)

    # x: (N=2, C=4, H=16, W=16), NCHW like PyTorch
    x = jax.random.normal(kx, (2, in_channels, 16, 16), dtype=jnp.float32)
    # weight init matches nn.Parameter(torch.rand(shape) * 0.001): uniform[0,1e-3)
    weight = jax.random.uniform(
        kw, (out_channels, in_channels, kernel_size, kernel_size),
        dtype=jnp.float32) * 0.001

    y = xnor_conv2d(x, weight, stride=stride, padding=padding)
    y = jax.block_until_ready(y)

    y_ref = jax.block_until_ready(_reference(x, weight, stride, padding))
    assert y.shape == y_ref.shape == (2, out_channels, 16, 16)
    assert jnp.allclose(y, y_ref, atol=1e-4, rtol=1e-4)

    print("KERNEL_OK")
</pallas_src>

<mosaic_0001>
module attributes {stable_mosaic.version = 11 : i64} {
  func.func @_xnor_matmul_kernel(%arg0: i32, %arg1: i32, %arg2: i32, %arg3: memref<1x256x128xbf16, #tpu.memory_space<vmem>>, %arg4: memref<128x128xbf16, #tpu.memory_space<vmem>>, %arg5: memref<1x1x128xf32, #tpu.memory_space<vmem>>, %arg6: memref<1x256x128xf32, #tpu.memory_space<vmem>>) attributes {dimension_semantics = [#tpu.dimension_semantics<parallel>, #tpu.dimension_semantics<parallel>, #tpu.dimension_semantics<arbitrary>], iteration_bounds = array<i64: 2, 1, 1>, scalar_prefetch = 0 : i64, scratch_operands = 0 : i64, tpu.core_type = #tpu.core_type<tc>, window_params = [{transform_indices = @transform_0, window_bounds = array<i64: 1, 256, 128>}, {transform_indices = @transform_1, window_bounds = array<i64: 128, 128>}, {transform_indices = @transform_2, window_bounds = array<i64: 1, 1, 128>}, {transform_indices = @transform_3, window_bounds = array<i64: 1, 256, 128>}]} {
    %c0_i32 = arith.constant 0 : i32
    %0 = arith.cmpi eq, %arg2, %c0_i32 : i32
    %1 = arith.extui %0 : i1 to i32
    %c0_i32_0 = arith.constant 0 : i32
    %2 = arith.cmpi ne, %1, %c0_i32_0 : i32
    scf.if %2 {
      %cst_13 = arith.constant 0.000000e+00 : f32
      %16 = vector.broadcast %cst_13 : f32 to vector<256x128xf32>
      %c0_14 = arith.constant 0 : index
      %c0_15 = arith.constant 0 : index
      %c0_16 = arith.constant 0 : index
      %17 = vector.load %arg6[%c0_14, %c0_15, %c0_16] : memref<1x256x128xf32, #tpu.memory_space<vmem>>, vector<1x256x128xf32>
      %18 = vector.shape_cast %17 : vector<1x256x128xf32> to vector<256x128xf32>
      %19 = vector.shape_cast %16 : vector<256x128xf32> to vector<1x256x128xf32>
      tpu.vector_store %arg6[%c0_14, %c0_15, %c0_16], %19 {strides = array<i32>} : memref<1x256x128xf32, #tpu.memory_space<vmem>>, vector<1x256x128xf32>,
    } else {
    }
    %c0 = arith.constant 0 : index
    %c0_1 = arith.constant 0 : index
    %c0_2 = arith.constant 0 : index
    %3 = vector.load %arg6[%c0, %c0_1, %c0_2] : memref<1x256x128xf32, #tpu.memory_space<vmem>>, vector<1x256x128xf32>
    %4 = vector.shape_cast %3 : vector<1x256x128xf32> to vector<256x128xf32>
    %c0_3 = arith.constant 0 : index
    %c0_4 = arith.constant 0 : index
    %c0_5 = arith.constant 0 : index
    %5 = vector.load %arg3[%c0_3, %c0_4, %c0_5] : memref<1x256x128xbf16, #tpu.memory_space<vmem>>, vector<1x256x128xbf16>
    %6 = vector.shape_cast %5 : vector<1x256x128xbf16> to vector<256x128xbf16>
    %c0_6 = arith.constant 0 : index
    %c0_7 = arith.constant 0 : index
    %7 = vector.load %arg4[%c0_6, %c0_7] : memref<128x128xbf16, #tpu.memory_space<vmem>>, vector<128x128xbf16>
    %cst = arith.constant dense<0.000000e+00> : vector<256x128xf32>
    %8 = tpu.matmul %6, %7, %cst {dimension_numbers = #tpu.dot_dimension_numbers<[1], [0], [0], [1], [0, 0, 1, 1], [], []>} : vector<256x128xbf16>, vector<128x128xbf16>, vector<256x128xf32> -> vector<256x128xf32>
    %9 = arith.addf %4, %8 : vector<256x128xf32>
    %c0_8 = arith.constant 0 : index
    %c0_9 = arith.constant 0 : index
    %c0_10 = arith.constant 0 : index
    %10 = vector.load %arg6[%c0_8, %c0_9, %c0_10] : memref<1x256x128xf32, #tpu.memory_space<vmem>>, vector<1x256x128xf32>
    %11 = vector.shape_cast %10 : vector<1x256x128xf32> to vector<256x128xf32>
    %12 = vector.shape_cast %9 : vector<256x128xf32> to vector<1x256x128xf32>
    tpu.vector_store %arg6[%c0_8, %c0_9, %c0_10], %12 {strides = array<i32>} : memref<1x256x128xf32, #tpu.memory_space<vmem>>, vector<1x256x128xf32>,
    %c0_i32_11 = arith.constant 0 : i32
    %13 = arith.cmpi eq, %arg2, %c0_i32_11 : i32
    %14 = arith.extui %13 : i1 to i32
    %c0_i32_12 = arith.constant 0 : i32
    %15 = arith.cmpi ne, %14, %c0_i32_12 : i32
    scf.if %15 {
      %c0_13 = arith.constant 0 : index
      %c0_14 = arith.constant 0 : index
      %c0_15 = arith.constant 0 : index
      %16 = vector.load %arg6[%c0_13, %c0_14, %c0_15] : memref<1x256x128xf32, #tpu.memory_space<vmem>>, vector<1x256x128xf32>
      %17 = vector.shape_cast %16 : vector<1x256x128xf32> to vector<256x128xf32>
      %c0_16 = arith.constant 0 : index
      %c0_17 = arith.constant 0 : index
      %c0_18 = arith.constant 0 : index
      %18 = vector.load %arg5[%c0_16, %c0_17, %c0_18] : memref<1x1x128xf32, #tpu.memory_space<vmem>>, vector<1x1x128xf32>
      %19 = vector.shape_cast %18 : vector<1x1x128xf32> to vector<1x128xf32>
      %20 = vector.broadcast %19 : vector<1x128xf32> to vector<256x128xf32>
      %21 = arith.mulf %17, %20 : vector<256x128xf32>
      %c0_19 = arith.constant 0 : index
      %c0_20 = arith.constant 0 : index
      %c0_21 = arith.constant 0 : index
      %22 = vector.load %arg6[%c0_19, %c0_20, %c0_21] : memref<1x256x128xf32, #tpu.memory_space<vmem>>, vector<1x256x128xf32>
      %23 = vector.shape_cast %22 : vector<1x256x128xf32> to vector<256x128xf32>
      %24 = vector.shape_cast %21 : vector<256x128xf32> to vector<1x256x128xf32>
      tpu.vector_store %arg6[%c0_19, %c0_20, %c0_21], %24 {strides = array<i32>} : memref<1x256x128xf32, #tpu.memory_space<vmem>>, vector<1x256x128xf32>,
    } else {
    }
    return
  }
  func.func @transform_0(%arg0: i32, %arg1: i32, %arg2: i32) -> (i32, i32, i32) {
    %c0_i32 = arith.constant 0 : i32
    return %arg0, %arg1, %arg2 : i32, i32, i32
  }
  func.func @transform_1(%arg0: i32, %arg1: i32, %arg2: i32) -> (i32, i32) {
    %c0_i32 = arith.constant 0 : i32
    %c0_i32_0 = arith.constant 0 : i32
    return %arg2, %c0_i32 : i32, i32
  }
  func.func @transform_2(%arg0: i32, %arg1: i32, %arg2: i32) -> (i32, i32, i32) {
    %c0_i32 = arith.constant 0 : i32
    %c0_i32_0 = arith.constant 0 : i32
    %c0_i32_1 = arith.constant 0 : i32
    return %arg0, %c0_i32, %c0_i32_0 : i32, i32, i32
  }
  func.func @transform_3(%arg0: i32, %arg1: i32, %arg2: i32) -> (i32, i32, i32) {
    %c0_i32 = arith.constant 0 : i32
    %c0_i32_0 = arith.constant 0 : i32
    return %arg0, %arg1, %c0_i32 : i32, i32, i32
  }
}

</mosaic_0001>

<llo_original>
// kernel: tpu_custom_call.1
$region0: #{tpu_custom_call.1}
  #allocation0 [shape = 'u32[]', space=smem, size = 0x4, offset = 0x4, fixed_abs, tag = 'smem constant byte address 0x4 - core index']
  #allocation1 [shape = 'u32[144,128]{1,0:T(1,128)}', space=vmem, size = 0x12000, scoped, tag = 'internal scratch']
  %s0 = inlined_call_operand.hbm [shape: bf16[2,256,128], index: 0, kind: input, shape index: {}]
  %s1 = inlined_call_operand.hbm [shape: bf16[128,128], index: 1, kind: input, shape index: {}]
  %s2 = inlined_call_operand.vmem [shape: f32[2,1,128], index: 2, kind: input, shape index: {}]
  %s3 = inlined_call_operand.hbm [shape: f32[2,256,128], index: 3, kind: output, shape index: {}]
  %s4 = sld [smem:[#allocation0]]
  $region61: #{tpu_custom_call.1} parent=0
    _
  %s6 = ssub.s32 1, %s4
  %s7 = scalar_select 0, %s6, %s4
  $region1: #{tpu_custom_call.1} parent=0
    #allocation2 [shape = 'u8[131072]{0}', space=vmem, size = 0x20000, scoped, tag = 'input window, operand 0']
    #allocation3 [shape = 's32[2]{0}', space=sflag, size = 0x8, scoped, tag = 'scoped memory for tpu_custom_call.1']
    #allocation4 [shape = 's32[2]{0}', space=sflag, size = 0x8, scoped, tag = 'scoped memory for tpu_custom_call.1']
    #allocation5 [shape = 'u8[32768]{0}', space=vmem, size = 0x8000, scoped, tag = 'input window, operand 1, single buffered']
    #allocation6 [shape = 's32[1]{0}', space=sflag, size = 0x4, scoped, tag = 'scoped memory for tpu_custom_call.1']
    #allocation7 [shape = 'u8[262144]{0}', space=vmem, size = 0x40000, scoped, tag = 'output window, operand 0']
    %8 = vsyncpa [#allocation3], 0
    %s9 = scalar_lea.sflag [#allocation3], 1
    %10 = vsyncpa %s9, 0
    %11 = vsyncpa [#allocation6], 0
    %12 = vsyncpa [#allocation4], 0
    %s13 = scalar_lea.sflag [#allocation4], 1
    %14 = vsyncpa %s13, 0
    loop: start=0, step=1, limit=4
    $region2: #{tpu_custom_call.1} parent=1 // loop_pre_header
      _
    $region3: #{tpu_custom_call.1} parent=1 // loop_header
      %s16 = sphi 0, %s20
      %p17 = scmp.ge.s32.totalorder %s16, 4
      %s23 = sphi 0, %s42
      %s24 = sphi 0, %s38
      %s25 = sphi 0, %s34
      %s26 = sphi 0, %s23
      %s27 = sphi 0, %s24
      %s28 = sphi 0, %s25
      %s29 = sphi 0, %s26
      %s30 = sphi 0, %s27
      %s31 = sphi 0, %s28
      %s49 = sphi 0, %s51
      %s52 = sphi 0, %s49
      %s53 = sphi 0, %s52
      %s69 = sphi 0, %s53
      %s75 = sphi 0, %s77
      %s78 = sphi 0, %s75
      %s79 = sphi 0, %s78
      %s95 = sphi 0, %s79
      %s101 = sphi 0, %s103
      %s104 = sphi 0, %s101
      %s105 = sphi 0, %s104
      %s121 = sphi 0, %s105
      %s129 = sphi 0, %s131
      %s132 = sphi 0, %s129
      %s133 = sphi 0, %s132
      %s149 = sphi 0, %s133
    $region4: #{tpu_custom_call.1} parent=1 // loop_header_branch
      %19 = sbr.rel (%p17) target = $region8
    $region5: #{tpu_custom_call.1} parent=1 // loop_body
      %s21 = ssub.s32 %s16, 1
      %s22 = ssub.s32 %s16, 2
      %s32 = sadd.s32 1, %s25
      %p33 = scmp.ge.s32.totalorder %s32, 1
      %s34 = scalar_select %p33, 0, %s32
      %s35 = sadd.s32 1, %s24
      %s36 = scalar_select %p33, %s35, %s24
      %p37 = scmp.ge.s32.totalorder %s36, 1
      %s38 = scalar_select %p37, 0, %s36
      %s39 = sadd.s32 1, %s23
      %s40 = scalar_select %p37, %s39, %s23
      %p41 = scmp.ge.s32.totalorder %s40, 2
      %s42 = scalar_select %p41, 0, %s40
      %s43 = ssub.s32 %s23, %s42
      %s44 = ssub.s32 %s24, %s38
      %s45 = sor.u32 %s43, %s44
      %s46 = ssub.s32 %s25, %s34
      %s47 = sor.u32 %s45, %s46
      %p48 = scmp.eq.s32.totalorder %s47, 0
      %s50 = sadd.s32 %s49, 1
      %s51 = scalar_select %p48, %s49, %s50
      %p54 = pneg %p48
      %p55 = scmp.eq.s32.totalorder %s16, 1
      %p56 = por %p54, %p55
      %p57 = scmp.ne.s32.totalorder %s49, %s52
      %p58 = scmp.eq.s32.totalorder %s16, 0
      %p59 = por %p57, %p58
      %p60 = scmp.ne.s32.totalorder %s49, %s52
      %p61 = scmp.eq.s32.totalorder %s21, 1
      %p62 = por %p60, %p61
      %p63 = scmp.ne.s32.totalorder %s52, %s53
      %p64 = scmp.eq.s32.totalorder %s21, 0
      %p65 = por %p63, %p64
      %p66 = scmp.ne.s32.totalorder %s52, %s53
      %p67 = scmp.eq.s32.totalorder %s22, 1
      %p68 = por %p66, %p67
      %p70 = scmp.ne.s32.totalorder %s53, %s69
      %p71 = scmp.eq.s32.totalorder %s22, 0
      %p72 = por %p70, %p71
      %s73 = ssub.s32 %s25, %s34
      %p74 = scmp.eq.s32.totalorder %s73, 0
      %s76 = sadd.s32 %s75, 1
      %s77 = scalar_select %p74, %s75, %s76
      %p80 = pneg %p74
      %p81 = scmp.eq.s32.totalorder %s16, 1
      %p82 = por %p80, %p81
      %p83 = scmp.ne.s32.totalorder %s75, %s78
      %p84 = scmp.eq.s32.totalorder %s16, 0
      %p85 = por %p83, %p84
      %p86 = scmp.ne.s32.totalorder %s75, %s78
      %p87 = scmp.eq.s32.totalorder %s21, 1
      %p88 = por %p86, %p87
      %p89 = scmp.ne.s32.totalorder %s78, %s79
      %p90 = scmp.eq.s32.totalorder %s21, 0
      %p91 = por %p89, %p90
      %p92 = scmp.ne.s32.totalorder %s78, %s79
      %p93 = scmp.eq.s32.totalorder %s22, 1
      %p94 = por %p92, %p93
      %p96 = scmp.ne.s32.totalorder %s79, %s95
      %p97 = scmp.eq.s32.totalorder %s22, 0
      %p98 = por %p96, %p97
      %s99 = ssub.s32 %s23, %s42
      %p100 = scmp.eq.s32.totalorder %s99, 0
      %s102 = sadd.s32 %s101, 1
      %s103 = scalar_select %p100, %s101, %s102
      %p106 = pneg %p100
      %p107 = scmp.eq.s32.totalorder %s16, 1
      %p108 = por %p106, %p107
      %p109 = scmp.ne.s32.totalorder %s101, %s104
      %p110 = scmp.eq.s32.totalorder %s16, 0
      %p111 = por %p109, %p110
      %p112 = scmp.ne.s32.totalorder %s101, %s104
      %p113 = scmp.eq.s32.totalorder %s21, 1
      %p114 = por %p112, %p113
      %p115 = scmp.ne.s32.totalorder %s104, %s105
      %p116 = scmp.eq.s32.totalorder %s21, 0
      %p117 = por %p115, %p116
      %p118 = scmp.ne.s32.totalorder %s104, %s105
      %p119 = scmp.eq.s32.totalorder %s22, 1
      %p120 = por %p118, %p119
      %p122 = scmp.ne.s32.totalorder %s105, %s121
      %p123 = scmp.eq.s32.totalorder %s22, 0
      %p124 = por %p122, %p123
      %s125 = ssub.s32 %s23, %s42
      %s126 = ssub.s32 %s24, %s38
      %s127 = sor.u32 %s125, %s126
      %p128 = scmp.eq.s32.totalorder %s127, 0
      %s130 = sadd.s32 %s129, 1
      %s131 = scalar_select %p128, %s129, %s130
      %p134 = pneg %p128
      %p135 = scmp.eq.s32.totalorder %s16, 1
      %p136 = por %p134, %p135
      %p137 = scmp.ne.s32.totalorder %s129, %s132
      %p138 = scmp.eq.s32.totalorder %s16, 0
      %p139 = por %p137, %p138
      %p140 = scmp.ne.s32.totalorder %s129, %s132
      %p141 = scmp.eq.s32.totalorder %s21, 1
      %p142 = por %p140, %p141
      %p143 = scmp.ne.s32.totalorder %s132, %s133
      %p144 = scmp.eq.s32.totalorder %s21, 0
      %p145 = por %p143, %p144
      %p146 = scmp.ne.s32.totalorder %s132, %s133
      %p147 = scmp.eq.s32.totalorder %s22, 1
      %p148 = por %p146, %p147
      %p150 = scmp.ne.s32.totalorder %s133, %s149
      %p151 = scmp.eq.s32.totalorder %s22, 0
      %p152 = por %p150, %p151
      %p153 = scmp.le.s32.totalorder 1, %s16
      %p154 = scmp.lt.s32.totalorder %s16, 3
      %p155 = pnand %p153, %p154
      %p156 = pneg %p155
      // Predicated region
      $region9: #{tpu_custom_call.1} parent=5 // pred_check
        _
      $region10: #{tpu_custom_call.1} parent=5 // pred_check_branch
        %158 = sbr.rel (%p155) target = $region12
      $region11: #{tpu_custom_call.1} parent=5 // pred_region
        %s159 = ssub.s32 %s16, 1
        // Predicated region
        $region13: #{tpu_custom_call.1} parent=11 // pred_check
          %p160 = pneg %p91
        $region14: #{tpu_custom_call.1} parent=11 // pred_check_branch
          %162 = sbr.rel (%p160) target = $region16
        $region15: #{tpu_custom_call.1} parent=11 // pred_region
          %s163 = smul.u32 16, %s28
          %s165 = ssub.s32 1024, 1024
          %166 = vsyncadd [#allocation6], %s165
          %s167 = smul.addr %s163, 64
          %s168 = scalar_lea.hbm %s1, %s167
          %s169 = sshll.u32 [#allocation5], 4
          %s170 = int_to_ptr.vmem [resolvable:$true] %s169
          %175 = dma.hbm_to_vmem [thread:$0]  %s168, 1024, %s170, [#allocation6], 64, 64, 4
        $region16: #{tpu_custom_call.1} parent=11 // pred_fallthru
          _
      $region12: #{tpu_custom_call.1} parent=5 // pred_fallthru
        _
      %p176 = scmp.lt.s32.totalorder %s16, 2
      // Predicated region
      $region17: #{tpu_custom_call.1} parent=5 // pred_check
        %p177 = pneg %p176
      $region18: #{tpu_custom_call.1} parent=5 // pred_check_branch
        %179 = sbr.rel (%p177) target = $region20
      $region19: #{tpu_custom_call.1} parent=5 // pred_region
        // Predicated region
        $region21: #{tpu_custom_call.1} parent=19 // pred_check
          %p180 = pneg %p59
        $region22: #{tpu_custom_call.1} parent=19 // pred_check_branch
          %182 = sbr.rel (%p180) target = $region24
        $region23: #{tpu_custom_call.1} parent=19 // pred_region
          %s183 = sand.u32 %s49, 1
          %s184 = scalar_lea.sflag [#allocation3], %s183
          %s185 = sand.u32 %s49, 1
          %s186 = smul.addr %s185, 128
          %s187 = scalar_lea.vmem [#allocation2], %s186
          %s188 = smul.u32 32, %s24
          %s190 = ssub.s32 2048, 2048
          %191 = vsyncadd %s184, %s190
          %s192 = sadd.s32 %s25, %s188
          %s193 = smul.addr %s23, 32
          %s194 = sadd.s32 %s192, %s193
          %s195 = smul.addr %s194, 64
          %s196 = scalar_lea.hbm %s0, %s195
          %s197 = sshll.u32 %s187, 4
          %s198 = int_to_ptr.vmem [resolvable:$true] %s197
          %203 = dma.hbm_to_vmem [thread:$0]  %s196, 2048, %s198, %s184, 64, 64, 4
        $region24: #{tpu_custom_call.1} parent=19 // pred_fallthru
          _
        // Predicated region
        $region25: #{tpu_custom_call.1} parent=19 // pred_check
          %p204 = pneg %p111
        $region26: #{tpu_custom_call.1} parent=19 // pred_check_branch
          %206 = sbr.rel (%p204) target = $region28
        $region27: #{tpu_custom_call.1} parent=19 // pred_region
          %p207 = scmp.lt.s32.totalorder %s23, 1
          %s208 = scalar_select %p207, %s23, 1
          %s209 = scalar_lea.vmem %s2, %s208
        $region28: #{tpu_custom_call.1} parent=19 // pred_fallthru
          _
      $region20: #{tpu_custom_call.1} parent=5 // pred_fallthru
        _
      %p210 = scmp.le.s32.totalorder 1, %s16
      %p211 = scmp.lt.s32.totalorder %s16, 3
      %p212 = pnand %p210, %p211
      %p213 = pneg %p212
      // Predicated region
      $region29: #{tpu_custom_call.1} parent=5 // pred_check
        _
      $region30: #{tpu_custom_call.1} parent=5 // pred_check_branch
        %215 = sbr.rel (%p212) target = $region32
      $region31: #{tpu_custom_call.1} parent=5 // pred_region
        %s216 = ssub.s32 %s16, 1
        %s217 = sand.u32 %s52, 1
        %s218 = scalar_lea.sflag [#allocation3], %s217
        %s219 = sand.u32 %s52, 1
        %s220 = smul.addr %s219, 128
        %s221 = scalar_lea.vmem [#allocation2], %s220
        // Predicated region
        $region33: #{tpu_custom_call.1} parent=31 // pred_check
          %p222 = pneg %p65
        $region34: #{tpu_custom_call.1} parent=31 // pred_check_branch
          %224 = sbr.rel (%p222) target = $region36
        $region35: #{tpu_custom_call.1} parent=31 // pred_region
          %225 = dma.done %s218, 2048
        $region36: #{tpu_custom_call.1} parent=31 // pred_fallthru
          _
        // Predicated region
        $region37: #{tpu_custom_call.1} parent=31 // pred_check
          %p226 = pneg %p91
        $region38: #{tpu_custom_call.1} parent=31 // pred_check_branch
          %228 = sbr.rel (%p226) target = $region40
        $region39: #{tpu_custom_call.1} parent=31 // pred_region
          %229 = dma.done [#allocation6], 1024
        $region40: #{tpu_custom_call.1} parent=31 // pred_fallthru
          _
        %s230 = sand.u32 %s52, 1
        %s231 = scalar_lea.sflag [#allocation3], %s230
        %s232 = sand.u32 %s52, 1
        %s233 = smul.addr %s232, 128
        %s234 = scalar_lea.vmem [#allocation2], %s233
        %p235 = pneg %p65
        %p236 = pneg %p62
        %p237 = pneg %p91
        %p238 = pneg %p88
        %p239 = scmp.lt.s32.totalorder %s26, 1
        %s240 = scalar_select %p239, %s26, 1
        %s241 = scalar_lea.vmem %s2, %s240
        %p242 = pneg %p117
        %p243 = pneg %p114
        %p244 = pneg %p145
        %p245 = pneg %p142
        %s246 = sand.u32 %s132, 1
        %s247 = scalar_lea.sflag [#allocation4], %s246
        %s248 = sand.u32 %s132, 1
        %s249 = smul.addr %s248, 256
        %s250 = scalar_lea.vmem [#allocation7], %s249
        %s251 = smul.u32 32, %s27
        %s252 = smul.u32 16, %s28
        %p253 = scmp.lt.s32.totalorder %s26, 1
        %s254 = scalar_select %p253, %s26, 1
        %s255 = scalar_lea.vmem %s2, %s254
        %s256 = smul.u32 32, %s27
        %p258 = scmp.eq.s32.totalorder %s28, 0
        // Predicated region
        $region41: #{tpu_custom_call.1} parent=31 // pred_check
          %p259 = pneg %p258
        $region42: #{tpu_custom_call.1} parent=31 // pred_check_branch
          %261 = sbr.rel (%p259) target = $region44
        $region43: #{tpu_custom_call.1} parent=31 // pred_region
          %262 = vst [vmem:[%s250] sm:$0xff] 0.0
          %263 = vst [vmem:[%s250 + $0x8] sm:$0xff] 0.0
          %264 = vst [vmem:[%s250 + $0x10] sm:$0xff] 0.0
          %265 = vst [vmem:[%s250 + $0x18] sm:$0xff] 0.0
          %266 = vst [vmem:[%s250 + $0x20] sm:$0xff] 0.0
          %267 = vst [vmem:[%s250 + $0x28] sm:$0xff] 0.0
          %268 = vst [vmem:[%s250 + $0x30] sm:$0xff] 0.0
          %269 = vst [vmem:[%s250 + $0x38] sm:$0xff] 0.0
          %270 = vst [vmem:[%s250 + $0x40] sm:$0xff] 0.0
          %271 = vst [vmem:[%s250 + $0x48] sm:$0xff] 0.0
          %272 = vst [vmem:[%s250 + $0x50] sm:$0xff] 0.0
          %273 = vst [vmem:[%s250 + $0x58] sm:$0xff] 0.0
          %274 = vst [vmem:[%s250 + $0x60] sm:$0xff] 0.0
          %275 = vst [vmem:[%s250 + $0x68] sm:$0xff] 0.0
          %276 = vst [vmem:[%s250 + $0x70] sm:$0xff] 0.0
          %277 = vst [vmem:[%s250 + $0x78] sm:$0xff] 0.0
          %278 = vst [vmem:[%s250 + $0x80] sm:$0xff] 0.0
          %279 = vst [vmem:[%s250 + $0x88] sm:$0xff] 0.0
          %280 = vst [vmem:[%s250 + $0x90] sm:$0xff] 0.0
          %281 = vst [vmem:[%s250 + $0x98] sm:$0xff] 0.0
          %282 = vst [vmem:[%s250 + $0xa0] sm:$0xff] 0.0
          %283 = vst [vmem:[%s250 + $0xa8] sm:$0xff] 0.0
          %284 = vst [vmem:[%s250 + $0xb0] sm:$0xff] 0.0
          %285 = vst [vmem:[%s250 + $0xb8] sm:$0xff] 0.0
          %286 = vst [vmem:[%s250 + $0xc0] sm:$0xff] 0.0
          %287 = vst [vmem:[%s250 + $0xc8] sm:$0xff] 0.0
          %288 = vst [vmem:[%s250 + $0xd0] sm:$0xff] 0.0
          %289 = vst [vmem:[%s250 + $0xd8] sm:$0xff] 0.0
          %290 = vst [vmem:[%s250 + $0xe0] sm:$0xff] 0.0
          %291 = vst [vmem:[%s250 + $0xe8] sm:$0xff] 0.0
          %292 = vst [vmem:[%s250 + $0xf0] sm:$0xff] 0.0
          %293 = vst [vmem:[%s250 + $0xf8] sm:$0xff] 0.0
        $region44: #{tpu_custom_call.1} parent=31 // pred_fallthru
          _
        %v294 = vld [vmem:[%s250] sm:$0xff]
        %v295 = vld [vmem:[%s250 + $0x8] sm:$0xff]
        %v296 = vld [vmem:[%s250 + $0x10] sm:$0xff]
        %v297 = vld [vmem:[%s250 + $0x18] sm:$0xff]
        %v298 = vld [vmem:[%s250 + $0x20] sm:$0xff]
        %v299 = vld [vmem:[%s250 + $0x28] sm:$0xff]
        %v300 = vld [vmem:[%s250 + $0x30] sm:$0xff]
        %v301 = vld [vmem:[%s250 + $0x38] sm:$0xff]
        %v302 = vld [vmem:[%s250 + $0x40] sm:$0xff]
        %v303 = vld [vmem:[%s250 + $0x48] sm:$0xff]
        %v304 = vld [vmem:[%s250 + $0x50] sm:$0xff]
        %v305 = vld [vmem:[%s250 + $0x58] sm:$0xff]
        %v306 = vld [vmem:[%s250 + $0x60] sm:$0xff]
        %v307 = vld [vmem:[%s250 + $0x68] sm:$0xff]
        %v308 = vld [vmem:[%s250 + $0x70] sm:$0xff]
        %v309 = vld [vmem:[%s250 + $0x78] sm:$0xff]
        %v310 = vld [vmem:[%s250 + $0x80] sm:$0xff]
        %v311 = vld [vmem:[%s250 + $0x88] sm:$0xff]
        %v312 = vld [vmem:[%s250 + $0x90] sm:$0xff]
        %v313 = vld [vmem:[%s250 + $0x98] sm:$0xff]
        %v314 = vld [vmem:[%s250 + $0xa0] sm:$0xff]
        %v315 = vld [vmem:[%s250 + $0xa8] sm:$0xff]
        %v316 = vld [vmem:[%s250 + $0xb0] sm:$0xff]
        %v317 = vld [vmem:[%s250 + $0xb8] sm:$0xff]
        %v318 = vld [vmem:[%s250 + $0xc0] sm:$0xff]
        %v319 = vld [vmem:[%s250 + $0xc8] sm:$0xff]
        %v320 = vld [vmem:[%s250 + $0xd0] sm:$0xff]
        %v321 = vld [vmem:[%s250 + $0xd8] sm:$0xff]
        %v322 = vld [vmem:[%s250 + $0xe0] sm:$0xff]
        %v323 = vld [vmem:[%s250 + $0xe8] sm:$0xff]
        %v324 = vld [vmem:[%s250 + $0xf0] sm:$0xff]
        %v325 = vld [vmem:[%s250 + $0xf8] sm:$0xff]
        %v326 = vld [vmem:[%s221] sm:$0xf]
        %v327 = vld [vmem:[%s221 + $0x4] sm:$0xf]
        %v328 = vld [vmem:[%s221 + $0x8] sm:$0xf]
        %v329 = vld [vmem:[%s221 + $0xc] sm:$0xf]
        %v330 = vld [vmem:[%s221 + $0x10] sm:$0xf]
        %v331 = vld [vmem:[%s221 + $0x14] sm:$0xf]
        %v332 = vld [vmem:[%s221 + $0x18] sm:$0xf]
        %v333 = vld [vmem:[%s221 + $0x1c] sm:$0xf]
        %v334 = vld [vmem:[%s221 + $0x20] sm:$0xf]
        %v335 = vld [vmem:[%s221 + $0x24] sm:$0xf]
        %v336 = vld [vmem:[%s221 + $0x28] sm:$0xf]
        %v337 = vld [vmem:[%s221 + $0x2c] sm:$0xf]
        %v338 = vld [vmem:[%s221 + $0x30] sm:$0xf]
        %v339 = vld [vmem:[%s221 + $0x34] sm:$0xf]
        %v340 = vld [vmem:[%s221 + $0x38] sm:$0xf]
        %v341 = vld [vmem:[%s221 + $0x3c] sm:$0xf]
        %v342 = vld [vmem:[%s221 + $0x40] sm:$0xf]
        %v343 = vld [vmem:[%s221 + $0x44] sm:$0xf]
        %v344 = vld [vmem:[%s221 + $0x48] sm:$0xf]
        %v345 = vld [vmem:[%s221 + $0x4c] sm:$0xf]
        %v346 = vld [vmem:[%s221 + $0x50] sm:$0xf]
        %v347 = vld [vmem:[%s221 + $0x54] sm:$0xf]
        %v348 = vld [vmem:[%s221 + $0x58] sm:$0xf]
        %v349 = vld [vmem:[%s221 + $0x5c] sm:$0xf]
        %v350 = vld [vmem:[%s221 + $0x60] sm:$0xf]
        %v351 = vld [vmem:[%s221 + $0x64] sm:$0xf]
        %v352 = vld [vmem:[%s221 + $0x68] sm:$0xf]
        %v353 = vld [vmem:[%s221 + $0x6c] sm:$0xf]
        %v354 = vld [vmem:[%s221 + $0x70] sm:$0xf]
        %v355 = vld [vmem:[%s221 + $0x74] sm:$0xf]
        %v356 = vld [vmem:[%s221 + $0x78] sm:$0xf]
        %v357 = vld [vmem:[%s221 + $0x7c] sm:$0xf]
        %v358 = vld [vmem:[#allocation5] sm:$0xf]
        %v359 = vld [vmem:[#allocation5 + $0x4] sm:$0xf]
        %v360 = vld [vmem:[#allocation5 + $0x8] sm:$0xf]
        %v361 = vld [vmem:[#allocation5 + $0xc] sm:$0xf]
        %v362 = vld [vmem:[#allocation5 + $0x10] sm:$0xf]
        %v363 = vld [vmem:[#allocation5 + $0x14] sm:$0xf]
        %v364 = vld [vmem:[#allocation5 + $0x18] sm:$0xf]
        %v365 = vld [vmem:[#allocation5 + $0x1c] sm:$0xf]
        %v366 = vld [vmem:[#allocation5 + $0x20] sm:$0xf]
        %v367 = vld [vmem:[#allocation5 + $0x24] sm:$0xf]
        %v368 = vld [vmem:[#allocation5 + $0x28] sm:$0xf]
        %v369 = vld [vmem:[#allocation5 + $0x2c] sm:$0xf]
        %v370 = vld [vmem:[#allocation5 + $0x30] sm:$0xf]
        %v371 = vld [vmem:[#allocation5 + $0x34] sm:$0xf]
        %v372 = vld [vmem:[#allocation5 + $0x38] sm:$0xf]
        %v373 = vld [vmem:[#allocation5 + $0x3c] sm:$0xf]
        %v406 = vunpack.c.l.b16 %v326
        %v407 = vunpack.c.l.b16 %v327
        %v408 = vunpack.c.l.b16 %v328
        %v409 = vunpack.c.l.b16 %v329
        %v410 = vunpack.c.l.b16 %v330
        %v411 = vunpack.c.l.b16 %v331
        %v412 = vunpack.c.l.b16 %v332
        %v413 = vunpack.c.l.b16 %v333
        %v414 = vunpack.c.l.b16 %v334
        %v415 = vunpack.c.l.b16 %v335
        %v416 = vunpack.c.l.b16 %v336
        %v417 = vunpack.c.l.b16 %v337
        %v418 = vunpack.c.l.b16 %v338
        %v419 = vunpack.c.l.b16 %v339
        %v420 = vunpack.c.l.b16 %v340
        %v421 = vunpack.c.l.b16 %v341
        %v422 = vunpack.c.l.b16 %v342
        %v423 = vunpack.c.l.b16 %v343
        %v424 = vunpack.c.l.b16 %v344
        %v425 = vunpack.c.l.b16 %v345
        %v426 = vunpack.c.l.b16 %v346
        %v427 = vunpack.c.l.b16 %v347
        %v428 = vunpack.c.l.b16 %v348
        %v429 = vunpack.c.l.b16 %v349
        %v430 = vunpack.c.l.b16 %v350
        %v431 = vunpack.c.l.b16 %v351
        %v432 = vunpack.c.l.b16 %v352
        %v433 = vunpack.c.l.b16 %v353
        %v434 = vunpack.c.l.b16 %v354
        %v435 = vunpack.c.l.b16 %v355
        %v436 = vunpack.c.l.b16 %v356
        %v437 = vunpack.c.l.b16 %v357
        %v438 = vpack.c.b16 %v407, %v406
        %v439 = vpack.c.b16 %v409, %v408
        %v440 = vpack.c.b16 %v411, %v410
        %v441 = vpack.c.b16 %v413, %v412
        %v442 = vpack.c.b16 %v415, %v414
        %v443 = vpack.c.b16 %v417, %v416
        %v444 = vpack.c.b16 %v419, %v418
        %v445 = vpack.c.b16 %v421, %v420
        %v446 = vpack.c.b16 %v423, %v422
        %v447 = vpack.c.b16 %v425, %v424
        %v448 = vpack.c.b16 %v427, %v426
        %v449 = vpack.c.b16 %v429, %v428
        %v450 = vpack.c.b16 %v431, %v430
        %v451 = vpack.c.b16 %v433, %v432
        %v452 = vpack.c.b16 %v435, %v434
        %v453 = vpack.c.b16 %v437, %v436
        %v486 = vunpack.c.l.b16 %v358
        %v487 = vunpack.c.l.b16 %v359
        %v488 = vunpack.c.l.b16 %v360
        %v489 = vunpack.c.l.b16 %v361
        %v490 = vunpack.c.l.b16 %v362
        %v491 = vunpack.c.l.b16 %v363
        %v492 = vunpack.c.l.b16 %v364
        %v493 = vunpack.c.l.b16 %v365
        %v494 = vunpack.c.l.b16 %v366
        %v495 = vunpack.c.l.b16 %v367
        %v496 = vunpack.c.l.b16 %v368
        %v497 = vunpack.c.l.b16 %v369
        %v498 = vunpack.c.l.b16 %v370
        %v499 = vunpack.c.l.b16 %v371
        %v500 = vunpack.c.l.b16 %v372
        %v501 = vunpack.c.l.b16 %v373
        %v502 = vpack.c.b16 %v487, %v486
        %v503 = vpack.c.b16 %v489, %v488
        %v504 = vpack.c.b16 %v491, %v490
        %v505 = vpack.c.b16 %v493, %v492
        %v506 = vpack.c.b16 %v495, %v494
        %v507 = vpack.c.b16 %v497, %v496
        %v508 = vpack.c.b16 %v499, %v498
        %v509 = vpack.c.b16 %v501, %v500
        %518 = vmatprep.subr.bf16.mxu0 0
        %519 = vmatpush1.bf16.msra.mxu0 %v502
        %520 = vmatprep.subr.bf16.mxu0 0
        %521 = vmatpush1.bf16.msra.mxu0 %v503
        %522 = vmatprep.subr.bf16.mxu0 0
        %523 = vmatpush1.bf16.msra.mxu0 %v504
        %524 = vmatprep.subr.bf16.mxu0 0
        %525 = vmatpush1.bf16.msra.mxu0 %v505
        %526 = vmatprep.subr.bf16.mxu0 0
        %527 = vmatpush1.bf16.msra.mxu0 %v506
        %528 = vmatprep.subr.bf16.mxu0 0
        %529 = vmatpush1.bf16.msra.mxu0 %v507
        %530 = vmatprep.subr.bf16.mxu0 0
        %531 = vmatpush1.bf16.msra.mxu0 %v508
        %532 = vmatprep.subr.bf16.mxu0 0
        %533 = vmatpush1.bf16.msra.mxu0 %v509
        %534 = vmatprep.subr.bf16.mxu0 0
        %535 = vmatpush1.bf16.msra.mxu0 0
        %536 = vmatprep.subr.bf16.mxu0 0
        %537 = vmatpush1.bf16.msra.mxu0 0
        %538 = vmatprep.subr.bf16.mxu0 0
        %539 = vmatpush1.bf16.msra.mxu0 0
        %540 = vmatprep.subr.bf16.mxu0 0
        %541 = vmatpush1.bf16.msra.mxu0 0
        %542 = vmatprep.subr.bf16.mxu0 0
        %543 = vmatpush1.bf16.msra.mxu0 0
        %544 = vmatprep.subr.bf16.mxu0 0
        %545 = vmatpush1.bf16.msra.mxu0 0
        %546 = vmatprep.subr.bf16.mxu0 0
        %547 = vmatpush1.bf16.msra.mxu0 0
        %548 = vmatprep.subr.bf16.mxu0 0
        %549 = vmatpush1.bf16.msra.mxu0 0
        %550 = vmatprep.mubr.bf16.mxu0 0
        %551 = vmatmul.mubr.bf16.gmra.mrb[0].mxu0 %v438
        %v552 = vpop.f32.mrb[0].mxu0
        %v553 = vadd.f32 0.0, %v552
        %v554 = vpop.f32.mrb[0].mxu0
        %v555 = vpop.f32.mrb[0].mxu0
        %v556 = vadd.f32 0.0, %v555
        %v557 = vpop.f32.mrb[0].mxu0
        %558 = vmatprep.mubr.bf16.mxu0 0
        %559 = vmatmul.mubr.bf16.gmra.mrb[0].mxu0 %v439
        %v560 = vpop.f32.mrb[0].mxu0
        %v561 = vadd.f32 0.0, %v560
        %v562 = vpop.f32.mrb[0].mxu0
        %v563 = vpop.f32.mrb[0].mxu0
        %v564 = vadd.f32 0.0, %v563
        %v565 = vpop.f32.mrb[0].mxu0
        %566 = vmatprep.mubr.bf16.mxu0 0
        %567 = vmatmul.mubr.bf16.gmra.mrb[0].mxu0 %v440
        %v568 = vpop.f32.mrb[0].mxu0
        %v569 = vadd.f32 0.0, %v568
        %v570 = vpop.f32.mrb[0].mxu0
        %v571 = vpop.f32.mrb[0].mxu0
        %v572 = vadd.f32 0.0, %v571
        %v573 = vpop.f32.mrb[0].mxu0
        %574 = vmatprep.mubr.bf16.mxu0 0
        %575 = vmatmul.mubr.bf16.gmra.mrb[0].mxu0 %v441
        %v576 = vpop.f32.mrb[0].mxu0
        %v577 = vadd.f32 0.0, %v576
        %v578 = vpop.f32.mrb[0].mxu0
        %v579 = vpop.f32.mrb[0].mxu0
        %v580 = vadd.f32 0.0, %v579
        %v581 = vpop.f32.mrb[0].mxu0
        %582 = vmatprep.mubr.bf16.mxu0 0
        %583 = vmatmul.mubr.bf16.gmra.mrb[0].mxu0 %v442
        %v584 = vpop.f32.mrb[0].mxu0
        %v585 = vadd.f32 0.0, %v584
        %v586 = vpop.f32.mrb[0].mxu0
        %v587 = vpop.f32.mrb[0].mxu0
        %v588 = vadd.f32 0.0, %v587
        %v589 = vpop.f32.mrb[0].mxu0
        %590 = vmatprep.mubr.bf16.mxu0 0
        %591 = vmatmul.mubr.bf16.gmra.mrb[0].mxu0 %v443
        %v592 = vpop.f32.mrb[0].mxu0
        %v593 = vadd.f32 0.0, %v592
        %v594 = vpop.f32.mrb[0].mxu0
        %v595 = vpop.f32.mrb[0].mxu0
        %v596 = vadd.f32 0.0, %v595
        %v597 = vpop.f32.mrb[0].mxu0
        %598 = vmatprep.mubr.bf16.mxu0 0
        %599 = vmatmul.mubr.bf16.gmra.mrb[0].mxu0 %v444
        %v600 = vpop.f32.mrb[0].mxu0
        %v601 = vadd.f32 0.0, %v600
        %v602 = vpop.f32.mrb[0].mxu0
        %v603 = vpop.f32.mrb[0].mxu0
        %v604 = vadd.f32 0.0, %v603
        %v605 = vpop.f32.mrb[0].mxu0
        %606 = vmatprep.mubr.bf16.mxu0 0
        %607 = vmatmul.mubr.bf16.gmra.mrb[0].mxu0 %v445
        %v608 = vpop.f32.mrb[0].mxu0
        %v609 = vadd.f32 0.0, %v608
        %v610 = vpop.f32.mrb[0].mxu0
        %v611 = vpop.f32.mrb[0].mxu0
        %v612 = vadd.f32 0.0, %v611
        %v613 = vpop.f32.mrb[0].mxu0
        %614 = vmatprep.mubr.bf16.mxu0 0
        %615 = vmatmul.mubr.bf16.gmra.mrb[0].mxu0 %v446
        %v616 = vpop.f32.mrb[0].mxu0
        %v617 = vadd.f32 0.0, %v616
        %v618 = vpop.f32.mrb[0].mxu0
        %v619 = vpop.f32.mrb[0].mxu0
        %v620 = vadd.f32 0.0, %v619
        %v621 = vpop.f32.mrb[0].mxu0
        %622 = vmatprep.mubr.bf16.mxu0 0
        %623 = vmatmul.mubr.bf16.gmra.mrb[0].mxu0 %v447
        %v624 = vpop.f32.mrb[0].mxu0
        %v625 = vadd.f32 0.0, %v624
        %v626 = vpop.f32.mrb[0].mxu0
        %v627 = vpop.f32.mrb[0].mxu0
        %v628 = vadd.f32 0.0, %v627
        %v629 = vpop.f32.mrb[0].mxu0
        %630 = vmatprep.mubr.bf16.mxu0 0
        %631 = vmatmul.mubr.bf16.gmra.mrb[0].mxu0 %v448
        %v632 = vpop.f32.mrb[0].mxu0
        %v633 = vadd.f32 0.0, %v632
        %v634 = vpop.f32.mrb[0].mxu0
        %v635 = vpop.f32.mrb[0].mxu0
        %v636 = vadd.f32 0.0, %v635
        %v637 = vpop.f32.mrb[0].mxu0
        %638 = vmatprep.mubr.bf16.mxu0 0
        %639 = vmatmul.mubr.bf16.gmra.mrb[0].mxu0 %v449
        %v640 = vpop.f32.mrb[0].mxu0
        %v641 = vadd.f32 0.0, %v640
        %v642 = vpop.f32.mrb[0].mxu0
        %v643 = vpop.f32.mrb[0].mxu0
        %v644 = vadd.f32 0.0, %v643
        %v645 = vpop.f32.mrb[0].mxu0
        %646 = vmatprep.mubr.bf16.mxu0 0
        %647 = vmatmul.mubr.bf16.gmra.mrb[0].mxu0 %v450
        %v648 = vpop.f32.mrb[0].mxu0
        %v649 = vadd.f32 0.0, %v648
        %v650 = vpop.f32.mrb[0].mxu0
        %v651 = vpop.f32.mrb[0].mxu0
        %v652 = vadd.f32 0.0, %v651
        %v653 = vpop.f32.mrb[0].mxu0
        %654 = vmatprep.mubr.bf16.mxu0 0
        %655 = vmatmul.mubr.bf16.gmra.mrb[0].mxu0 %v451
        %v656 = vpop.f32.mrb[0].mxu0
        %v657 = vadd.f32 0.0, %v656
        %v658 = vpop.f32.mrb[0].mxu0
        %v659 = vpop.f32.mrb[0].mxu0
        %v660 = vadd.f32 0.0, %v659
        %v661 = vpop.f32.mrb[0].mxu0
        %662 = vmatprep.mubr.bf16.mxu0 0
        %663 = vmatmul.mubr.bf16.gmra.mrb[0].mxu0 %v452
        %v664 = vpop.f32.mrb[0].mxu0
        %v665 = vadd.f32 0.0, %v664
        %v666 = vpop.f32.mrb[0].mxu0
        %v667 = vpop.f32.mrb[0].mxu0
        %v668 = vadd.f32 0.0, %v667
        %v669 = vpop.f32.mrb[0].mxu0
        %670 = vmatprep.mubr.bf16.mxu0 0
        %671 = vmatmul.mubr.bf16.gmra.mrb[0].mxu0 %v453
        %v672 = vpop.f32.mrb[0].mxu0
        %v673 = vadd.f32 0.0, %v672
        %v674 = vpop.f32.mrb[0].mxu0
        %v675 = vpop.f32.mrb[0].mxu0
        %v676 = vadd.f32 0.0, %v675
        %v677 = vpop.f32.mrb[0].mxu0
        %678 = vdwg.mxu0
        %v679 = vadd.f32 %v294, %v553
        %v680 = vadd.f32 %v295, %v556
        %v681 = vadd.f32 %v296, %v561
        %v682 = vadd.f32 %v297, %v564
        %v683 = vadd.f32 %v298, %v569
        %v684 = vadd.f32 %v299, %v572
        %v685 = vadd.f32 %v300, %v577
        %v686 = vadd.f32 %v301, %v580
        %v687 = vadd.f32 %v302, %v585
        %v688 = vadd.f32 %v303, %v588
        %v689 = vadd.f32 %v304, %v593
        %v690 = vadd.f32 %v305, %v596
        %v691 = vadd.f32 %v306, %v601
        %v692 = vadd.f32 %v307, %v604
        %v693 = vadd.f32 %v308, %v609
        %v694 = vadd.f32 %v309, %v612
        %v695 = vadd.f32 %v310, %v617
        %v696 = vadd.f32 %v311, %v620
        %v697 = vadd.f32 %v312, %v625
        %v698 = vadd.f32 %v313, %v628
        %v699 = vadd.f32 %v314, %v633
        %v700 = vadd.f32 %v315, %v636
        %v701 = vadd.f32 %v316, %v641
        %v702 = vadd.f32 %v317, %v644
        %v703 = vadd.f32 %v318, %v649
        %v704 = vadd.f32 %v319, %v652
        %v705 = vadd.f32 %v320, %v657
        %v706 = vadd.f32 %v321, %v660
        %v707 = vadd.f32 %v322, %v665
        %v708 = vadd.f32 %v323, %v668
        %v709 = vadd.f32 %v324, %v673
        %v710 = vadd.f32 %v325, %v676
        %711 = vst [vmem:[%s250] sm:$0xff] %v679
        %712 = vst [vmem:[%s250 + $0x8] sm:$0xff] %v680
        %713 = vst [vmem:[%s250 + $0x10] sm:$0xff] %v681
        %714 = vst [vmem:[%s250 + $0x18] sm:$0xff] %v682
        %715 = vst [vmem:[%s250 + $0x20] sm:$0xff] %v683
        %716 = vst [vmem:[%s250 + $0x28] sm:$0xff] %v684
        %717 = vst [vmem:[%s250 + $0x30] sm:$0xff] %v685
        %718 = vst [vmem:[%s250 + $0x38] sm:$0xff] %v686
        %719 = vst [vmem:[%s250 + $0x40] sm:$0xff] %v687
        %720 = vst [vmem:[%s250 + $0x48] sm:$0xff] %v688
        %721 = vst [vmem:[%s250 + $0x50] sm:$0xff] %v689
        %722 = vst [vmem:[%s250 + $0x58] sm:$0xff] %v690
        %723 = vst [vmem:[%s250 + $0x60] sm:$0xff] %v691
        %724 = vst [vmem:[%s250 + $0x68] sm:$0xff] %v692
        %725 = vst [vmem:[%s250 + $0x70] sm:$0xff] %v693
        %726 = vst [vmem:[%s250 + $0x78] sm:$0xff] %v694
        %727 = vst [vmem:[%s250 + $0x80] sm:$0xff] %v695
        %728 = vst [vmem:[%s250 + $0x88] sm:$0xff] %v696
        %729 = vst [vmem:[%s250 + $0x90] sm:$0xff] %v697
        %730 = vst [vmem:[%s250 + $0x98] sm:$0xff] %v698
        %731 = vst [vmem:[%s250 + $0xa0] sm:$0xff] %v699
        %732 = vst [vmem:[%s250 + $0xa8] sm:$0xff] %v700
        %733 = vst [vmem:[%s250 + $0xb0] sm:$0xff] %v701
        %734 = vst [vmem:[%s250 + $0xb8] sm:$0xff] %v702
        %735 = vst [vmem:[%s250 + $0xc0] sm:$0xff] %v703
        %736 = vst [vmem:[%s250 + $0xc8] sm:$0xff] %v704
        %737 = vst [vmem:[%s250 + $0xd0] sm:$0xff] %v705
        %738 = vst [vmem:[%s250 + $0xd8] sm:$0xff] %v706
        %739 = vst [vmem:[%s250 + $0xe0] sm:$0xff] %v707
        %740 = vst [vmem:[%s250 + $0xe8] sm:$0xff] %v708
        %741 = vst [vmem:[%s250 + $0xf0] sm:$0xff] %v709
        %742 = vst [vmem:[%s250 + $0xf8] sm:$0xff] %v710
        // Predicated region
        $region45: #{tpu_custom_call.1} parent=31 // pred_check
          %p743 = pneg %p258
        $region46: #{tpu_custom_call.1} parent=31 // pred_check_branch
          %745 = sbr.rel (%p743) target = $region48
        $region47: #{tpu_custom_call.1} parent=31 // pred_region
          %v746 = vld [vmem:[%s250] sm:$0xff]
          %v747 = vld [vmem:[%s250 + $0x8] sm:$0xff]
          %v748 = vld [vmem:[%s250 + $0x10] sm:$0xff]
          %v749 = vld [vmem:[%s250 + $0x18] sm:$0xff]
          %v750 = vld [vmem:[%s250 + $0x20] sm:$0xff]
          %v751 = vld [vmem:[%s250 + $0x28] sm:$0xff]
          %v752 = vld [vmem:[%s250 + $0x30] sm:$0xff]
          %v753 = vld [vmem:[%s250 + $0x38] sm:$0xff]
          %v754 = vld [vmem:[%s250 + $0x40] sm:$0xff]
          %v755 = vld [vmem:[%s250 + $0x48] sm:$0xff]
          %v756 = vld [vmem:[%s250 + $0x50] sm:$0xff]
          %v757 = vld [vmem:[%s250 + $0x58] sm:$0xff]
          %v758 = vld [vmem:[%s250 + $0x60] sm:$0xff]
          %v759 = vld [vmem:[%s250 + $0x68] sm:$0xff]
          %v760 = vld [vmem:[%s250 + $0x70] sm:$0xff]
          %v761 = vld [vmem:[%s250 + $0x78] sm:$0xff]
          %v762 = vld [vmem:[%s250 + $0x80] sm:$0xff]
          %v763 = vld [vmem:[%s250 + $0x88] sm:$0xff]
          %v764 = vld [vmem:[%s250 + $0x90] sm:$0xff]
          %v765 = vld [vmem:[%s250 + $0x98] sm:$0xff]
          %v766 = vld [vmem:[%s250 + $0xa0] sm:$0xff]
          %v767 = vld [vmem:[%s250 + $0xa8] sm:$0xff]
          %v768 = vld [vmem:[%s250 + $0xb0] sm:$0xff]
          %v769 = vld [vmem:[%s250 + $0xb8] sm:$0xff]
          %v770 = vld [vmem:[%s250 + $0xc0] sm:$0xff]
          %v771 = vld [vmem:[%s250 + $0xc8] sm:$0xff]
          %v772 = vld [vmem:[%s250 + $0xd0] sm:$0xff]
          %v773 = vld [vmem:[%s250 + $0xd8] sm:$0xff]
          %v774 = vld [vmem:[%s250 + $0xe0] sm:$0xff]
          %v775 = vld [vmem:[%s250 + $0xe8] sm:$0xff]
          %v776 = vld [vmem:[%s250 + $0xf0] sm:$0xff]
          %v777 = vld [vmem:[%s250 + $0xf8] sm:$0xff]
          %v778 = vld [vmem:[%s255] sm:$0x1]
          %v780 = vlaneseq
          %v781 = vshrl.u32 %v780, 7
          %v782 = vsub.s32 0, %v781
          %v783 = vrot.slane %v778, %v782
          %v785 = vmul.f32 %v746, %v783
          %v786 = vmul.f32 %v747, %v783
          %v787 = vmul.f32 %v748, %v783
          %v788 = vmul.f32 %v749, %v783
          %v789 = vmul.f32 %v750, %v783
          %v790 = vmul.f32 %v751, %v783
          %v791 = vmul.f32 %v752, %v783
          %v792 = vmul.f32 %v753, %v783
          %v793 = vmul.f32 %v754, %v783
          %v794 = vmul.f32 %v755, %v783
          %v795 = vmul.f32 %v756, %v783
          %v796 = vmul.f32 %v757, %v783
          %v797 = vmul.f32 %v758, %v783
          %v798 = vmul.f32 %v759, %v783
          %v799 = vmul.f32 %v760, %v783
          %v800 = vmul.f32 %v761, %v783
          %v801 = vmul.f32 %v762, %v783
          %v802 = vmul.f32 %v763, %v783
          %v803 = vmul.f32 %v764, %v783
          %v804 = vmul.f32 %v765, %v783
          %v805 = vmul.f32 %v766, %v783
          %v806 = vmul.f32 %v767, %v783
          %v807 = vmul.f32 %v768, %v783
          %v808 = vmul.f32 %v769, %v783
          %v809 = vmul.f32 %v770, %v783
          %v810 = vmul.f32 %v771, %v783
          %v811 = vmul.f32 %v772, %v783
          %v812 = vmul.f32 %v773, %v783
          %v813 = vmul.f32 %v774, %v783
          %v814 = vmul.f32 %v775, %v783
          %v815 = vmul.f32 %v776, %v783
          %v816 = vmul.f32 %v777, %v783
          %817 = vst [vmem:[%s250] sm:$0xff] %v785
          %818 = vst [vmem:[%s250 + $0x8] sm:$0xff] %v786
          %819 = vst [vmem:[%s250 + $0x10] sm:$0xff] %v787
          %820 = vst [vmem:[%s250 + $0x18] sm:$0xff] %v788
          %821 = vst [vmem:[%s250 + $0x20] sm:$0xff] %v789
          %822 = vst [vmem:[%s250 + $0x28] sm:$0xff] %v790
          %823 = vst [vmem:[%s250 + $0x30] sm:$0xff] %v791
          %824 = vst [vmem:[%s250 + $0x38] sm:$0xff] %v792
          %825 = vst [vmem:[%s250 + $0x40] sm:$0xff] %v793
          %826 = vst [vmem:[%s250 + $0x48] sm:$0xff] %v794
          %827 = vst [vmem:[%s250 + $0x50] sm:$0xff] %v795
          %828 = vst [vmem:[%s250 + $0x58] sm:$0xff] %v796
          %829 = vst [vmem:[%s250 + $0x60] sm:$0xff] %v797
          %830 = vst [vmem:[%s250 + $0x68] sm:$0xff] %v798
          %831 = vst [vmem:[%s250 + $0x70] sm:$0xff] %v799
          %832 = vst [vmem:[%s250 + $0x78] sm:$0xff] %v800
          %833 = vst [vmem:[%s250 + $0x80] sm:$0xff] %v801
          %834 = vst [vmem:[%s250 + $0x88] sm:$0xff] %v802
          %835 = vst [vmem:[%s250 + $0x90] sm:$0xff] %v803
          %836 = vst [vmem:[%s250 + $0x98] sm:$0xff] %v804
          %837 = vst [vmem:[%s250 + $0xa0] sm:$0xff] %v805
          %838 = vst [vmem:[%s250 + $0xa8] sm:$0xff] %v806
          %839 = vst [vmem:[%s250 + $0xb0] sm:$0xff] %v807
          %840 = vst [vmem:[%s250 + $0xb8] sm:$0xff] %v808
          %841 = vst [vmem:[%s250 + $0xc0] sm:$0xff] %v809
          %842 = vst [vmem:[%s250 + $0xc8] sm:$0xff] %v810
          %843 = vst [vmem:[%s250 + $0xd0] sm:$0xff] %v811
          %844 = vst [vmem:[%s250 + $0xd8] sm:$0xff] %v812
          %845 = vst [vmem:[%s250 + $0xe0] sm:$0xff] %v813
          %846 = vst [vmem:[%s250 + $0xe8] sm:$0xff] %v814
          %847 = vst [vmem:[%s250 + $0xf0] sm:$0xff] %v815
          %848 = vst [vmem:[%s250 + $0xf8] sm:$0xff] %v816
        $region48: #{tpu_custom_call.1} parent=31 // pred_fallthru
          _
        %s849 = sand.u32 %s132, 1
        %s850 = scalar_lea.sflag [#allocation4], %s849
        %s851 = sand.u32 %s132, 1
        %s852 = smul.addr %s851, 256
        %s853 = scalar_lea.vmem [#allocation7], %s852
        // Predicated region
        $region49: #{tpu_custom_call.1} parent=31 // pred_check
          %p854 = pneg %p142
        $region50: #{tpu_custom_call.1} parent=31 // pred_check_branch
          %856 = sbr.rel (%p854) target = $region52
        $region51: #{tpu_custom_call.1} parent=31 // pred_region
          %s857 = smul.u32 32, %s27
          %s859 = ssub.s32 4096, 4096
          %860 = vsyncadd %s850, %s859
          %s861 = smul.addr %s26, 32
          %s862 = sadd.s32 %s857, %s861
          %s863 = smul.addr %s862, 128
          %s864 = scalar_lea.hbm %s3, %s863
          %s865 = sshll.u32 %s853, 4
          %s866 = int_to_ptr.vmem [resolvable:$true] %s865
          %871 = dma.vmem_to_hbm [thread:$0]  %s866, 4096, %s864, %s850, 128, 128, 8
        $region52: #{tpu_custom_call.1} parent=31 // pred_fallthru
          _
      $region32: #{tpu_custom_call.1} parent=5 // pred_fallthru
        _
      %p872 = scmp.le.s32.totalorder 2, %s16
      // Predicated region
      $region53: #{tpu_custom_call.1} parent=5 // pred_check
        %p873 = pneg %p872
      $region54: #{tpu_custom_call.1} parent=5 // pred_check_branch
        %875 = sbr.rel (%p873) target = $region56
      $region55: #{tpu_custom_call.1} parent=5 // pred_region
        %s876 = ssub.s32 %s16, 2
        // Predicated region
        $region57: #{tpu_custom_call.1} parent=55 // pred_check
          %p877 = pneg %p148
        $region58: #{tpu_custom_call.1} parent=55 // pred_check_branch
          %879 = sbr.rel (%p877) target = $region60
        $region59: #{tpu_custom_call.1} parent=55 // pred_region
          %s880 = sand.u32 %s133, 1
          %s881 = scalar_lea.sflag [#allocation4], %s880
          %s882 = sand.u32 %s133, 1
          %s883 = smul.addr %s882, 256
          %s884 = scalar_lea.vmem [#allocation7], %s883
          %885 = dma.done %s881, 4096
        $region60: #{tpu_custom_call.1} parent=55 // pred_fallthru
          _
      $region56: #{tpu_custom_call.1} parent=5 // pred_fallthru
        _
    $region6: #{tpu_custom_call.1} parent=1 // loop_footer
      %s20 = sadd.s32 1, %s16
    $region7: #{tpu_custom_call.1} parent=1 // loop_footer_branch
      %15 = sbr.rel target = $region3
    $region8: #{tpu_custom_call.1} parent=1 // loop_exit
      _
    %886 = vsyncpa [#allocation3], 1
    %s887 = scalar_lea.sflag [#allocation3], 1
    %888 = vsyncpa %s887, 1
    %889 = vsyncpa [#allocation6], 1
    %890 = vsyncpa [#allocation4], 1
    %s891 = scalar_lea.sflag [#allocation4], 1
    %892 = vsyncpa %s891, 1

</llo_original>
